<compile_context>
chip_gen: v6e
topology: v6e:2x2x1
jax: 0.10.0
libtpu: 0.0.40
codegen_flags: <defaults>
</compile_context>

<pallas_src>
import jax
import jax.numpy as jnp
from jax.experimental import pallas as pl
from jax.experimental.pallas import tpu as pltpu


def _policy_kernel(x_ref, w1t_ref, b1_ref, w2_ref, b2_ref, out_ref):
    xT = x_ref[...]          # (s_size, TILE_B)   batch on lanes (streamed)
    w1t = w1t_ref[...]       # (h_size, s_size)   resident
    b1 = b1_ref[...]         # (h_size, 1)        resident
    w2 = w2_ref[...]         # (h_size, a_size)   resident
    b2 = b2_ref[...]         # (a_size, 1)        resident

    s_size = xT.shape[0]
    h_size = w1t.shape[0]
    a_size = out_ref.shape[0]

    # ---- fc1: hT[j, b] = relu(sum_k W1[k, j] * x[b, k] + b1[j]) ----
    # K = s_size = 4 -> unrolled VPU broadcast-FMAs over the packed output.
    acc1 = w1t[:, 0:1] * xT[0:1, :]
    for k in range(1, s_size):                       # static unroll (K=4)
        acc1 = acc1 + w1t[:, k:k + 1] * xT[k:k + 1, :]
    hT = jnp.maximum(acc1 + b1, 0.0)                 # (h_size, TILE_B), packed

    # ---- fc2 + softmax ----
    if a_size == 2:
        # Two-class softmax == stable sigmoid of the logit difference.
        # One packed multiply + one XLU sublane-reduce replaces the old
        # 16-step broadcast-FMA loop; one exp + one EUP reciprocal replaces
        # the full softmax.
        dw = w2[:, 1:2] - w2[:, 0:1]                 # (h_size, 1)
        db = b2[1:2, :] - b2[0:1, :]                 # (1, 1)
        d = jnp.sum(dw * hT, axis=0, keepdims=True) + db    # (1, TILE_B)

        a = jnp.exp(-jnp.abs(d))                     # in (0, 1], no overflow
        denom = 1.0 + a
        inv = pl.reciprocal(denom, approx=True)      # EUP slot
        inv = inv * (2.0 - denom * inv)              # Newton step -> ~f32 acc
        p_big = inv                                  # prob of the larger logit
        p_small = a * inv                            # prob of the smaller logit
        pos = d >= 0.0                               # d = logit1 - logit0
        out_ref[0:1, :] = jnp.where(pos, p_small, p_big).astype(out_ref.dtype)
        out_ref[1:2, :] = jnp.where(pos, p_big, p_small).astype(out_ref.dtype)
    else:
        # General path: per-class multiply + sublane reduce, then softmax.
        rows = [jnp.sum(w2[:, c:c + 1] * hT, axis=0, keepdims=True)
                for c in range(a_size)]
        logitsT = jnp.concatenate(rows, axis=0) + b2          # (a_size, TILE_B)
        m = jnp.max(logitsT, axis=0, keepdims=True)
        e = jnp.exp(logitsT - m)
        denom = jnp.sum(e, axis=0, keepdims=True)
        inv = pl.reciprocal(denom, approx=True)
        inv = inv * (2.0 - denom * inv)
        out_ref[...] = (e * inv).astype(out_ref.dtype)


def policy_forward_fm(xt, w1, b1, w2, b2, tile_b=16384):
    """Feature-major fast path (no wrapper transposes).

    xt: (s_size, B); w1: (s_size, h_size); b1: (1, h_size);
    w2: (h_size, a_size); b2: (1, a_size).  Returns (a_size, B) float32.
    """
    s_size, B = xt.shape
    h_size = w1.shape[1]
    a_size = w2.shape[1]

    # Batch on the lane axis -> tile must be a multiple of 128 lanes.
    b_ceil = pl.cdiv(B, 128) * 128
    # Give the grid >=2 steps whenever possible so v7x's 2 TCs both get work
    # (harmless extra ~0.35us step on single-core v5e/v6e).
    if b_ceil >= 256:
        tile_b = min(tile_b, pl.cdiv(b_ceil // 2, 128) * 128)
    tile_b = max(128, min(tile_b, b_ceil))
    b_pad = pl.cdiv(B, tile_b) * tile_b
    grid = (b_pad // tile_b,)

    xt = xt.astype(jnp.float32)
    if b_pad != B:
        xt = jnp.pad(xt, ((0, 0), (0, b_pad - B)))   # padded lanes: bias-only, finite

    w1t = w1.T.astype(jnp.float32)                   # (h_size, s_size)
    b1c = b1.reshape(h_size, 1).astype(jnp.float32)  # (h_size, 1)
    w2f = w2.astype(jnp.float32)                     # (h_size, a_size)
    b2c = b2.reshape(a_size, 1).astype(jnp.float32)  # (a_size, 1)

    out_t = pl.pallas_call(
        _policy_kernel,
        out_shape=jax.ShapeDtypeStruct((a_size, b_pad), jnp.float32),
        grid_spec=pltpu.PrefetchScalarGridSpec(
            num_scalar_prefetch=0,
            grid=grid,
            in_specs=[
                pl.BlockSpec((s_size, tile_b), lambda i: (0, i)),   # x tile (streamed)
                pl.BlockSpec((h_size, s_size), lambda i: (0, 0)),   # W1^T (resident)
                pl.BlockSpec((h_size, 1), lambda i: (0, 0)),        # b1   (resident)
                pl.BlockSpec((h_size, a_size), lambda i: (0, 0)),   # W2   (resident)
                pl.BlockSpec((a_size, 1), lambda i: (0, 0)),        # b2   (resident)
            ],
            out_specs=pl.BlockSpec((a_size, tile_b), lambda i: (0, i)),
        ),
        compiler_params=pltpu.CompilerParams(
            dimension_semantics=("parallel",)),       # shard batch over TCs
    )(xt, w1t, b1c, w2f, b2c)

    return out_t[:, :B]


def policy_forward(x, w1, b1, w2, b2, tile_b=16384):
    """PyTorch-shaped contract: softmax(relu(x @ W1 + b1) @ W2 + b2, axis=1).

    x: (B, s_size) -> (B, a_size) float32.  For large batches prefer
    `policy_forward_fm` and keep states feature-major to skip the two
    wrapper-side transposes (extra HBM passes).
    """
    return policy_forward_fm(x.T, w1, b1, w2, b2, tile_b=tile_b).T


def init_params(key, s_size=4, h_size=16, a_size=2):
    # Deterministic init mimicking nn.Linear's uniform(-1/sqrt(fan_in), 1/sqrt(fan_in)).
    k1, k2, k3, k4 = jax.random.split(key, 4)
    lim1 = 1.0 / jnp.sqrt(jnp.float32(s_size))
    lim2 = 1.0 / jnp.sqrt(jnp.float32(h_size))
    # Stored as (in, out) so the math is x @ W (PyTorch stores (out, in)).
    w1 = jax.random.uniform(k1, (s_size, h_size), jnp.float32, -lim1, lim1)
    b1 = jax.random.uniform(k2, (1, h_size), jnp.float32, -lim1, lim1)
    w2 = jax.random.uniform(k3, (h_size, a_size), jnp.float32, -lim2, lim2)
    b2 = jax.random.uniform(k4, (1, a_size), jnp.float32, -lim2, lim2)
    return w1, b1, w2, b2


def _ref_forward(x, w1, b1, w2, b2):
    h = jnp.maximum(x @ w1 + b1, 0.0)
    return jax.nn.softmax(h @ w2 + b2, axis=1)


if __name__ == "__main__":
    key = jax.random.PRNGKey(0)
    kx, kp, kx2, kx3 = jax.random.split(key, 4)

    s_size, h_size, a_size = 4, 16, 2
    w1, b1, w2, b2 = init_params(kp, s_size, h_size, a_size)

    # Tiny batch (matches the PyTorch module's typical act() usage).
    x = jax.random.normal(kx, (2, s_size), jnp.float32)
    probs = jax.block_until_ready(policy_forward(x, w1, b1, w2, b2))
    probs_ref = _ref_forward(x, w1, b1, w2, b2)
    assert probs.shape == (2, a_size)
    assert jnp.allclose(probs, probs_ref, atol=1e-4, rtol=1e-4)
    assert jnp.allclose(jnp.sum(probs, axis=1), 1.0, atol=1e-4)

    # Ragged batch with a small tile -> padding + multi-step grid.
    x2 = jax.random.normal(kx2, (300, s_size), jnp.float32)
    probs2 = jax.block_until_ready(policy_forward(x2, w1, b1, w2, b2, tile_b=128))
    probs2_ref = _ref_forward(x2, w1, b1, w2, b2)
    assert probs2.shape == (300, a_size)
    assert jnp.allclose(probs2, probs2_ref, atol=1e-4, rtol=1e-4)
    assert jnp.allclose(jnp.sum(probs2, axis=1), 1.0, atol=1e-4)

    # Larger batch through the feature-major fast path (no wrapper transposes,
    # default tile, >=2 grid steps).
    x3 = jax.random.normal(kx3, (4096, s_size), jnp.float32)
    probs3_t = jax.block_until_ready(policy_forward_fm(x3.T, w1, b1, w2, b2))
    probs3_ref = _ref_forward(x3, w1, b1, w2, b2)
    assert probs3_t.shape == (a_size, 4096)
    assert jnp.allclose(probs3_t.T, probs3_ref, atol=1e-4, rtol=1e-4)
    assert jnp.allclose(jnp.sum(probs3_t, axis=0), 1.0, atol=1e-4)

    print("KERNEL_OK")
</pallas_src>

<mosaic_0001>
module attributes {stable_mosaic.version = 11 : i64} {
  func.func @_policy_kernel(%arg0: i32, %arg1: memref<4x128xf32, #tpu.memory_space<vmem>>, %arg2: memref<16x4xf32, #tpu.memory_space<vmem>>, %arg3: memref<16x1xf32, #tpu.memory_space<vmem>>, %arg4: memref<16x2xf32, #tpu.memory_space<vmem>>, %arg5: memref<2x1xf32, #tpu.memory_space<vmem>>, %arg6: memref<2x128xf32, #tpu.memory_space<vmem>>) attributes {dimension_semantics = [#tpu.dimension_semantics<parallel>], iteration_bounds = array<i64: 1>, scalar_prefetch = 0 : i64, scratch_operands = 0 : i64, tpu.core_type = #tpu.core_type<tc>, window_params = [{transform_indices = @transform_0, window_bounds = array<i64: 4, 128>}, {pipeline_mode = #tpu.pipeline_mode<synchronous>, transform_indices = @transform_1, window_bounds = array<i64: 16, 4>}, {pipeline_mode = #tpu.pipeline_mode<synchronous>, transform_indices = @transform_2, window_bounds = array<i64: 16, 1>}, {pipeline_mode = #tpu.pipeline_mode<synchronous>, transform_indices = @transform_3, window_bounds = array<i64: 16, 2>}, {pipeline_mode = #tpu.pipeline_mode<synchronous>, transform_indices = @transform_4, window_bounds = array<i64: 2, 1>}, {transform_indices = @transform_5, window_bounds = array<i64: 2, 128>}]} {
    %c0 = arith.constant 0 : index
    %c0_0 = arith.constant 0 : index
    %0 = vector.load %arg1[%c0, %c0_0] : memref<4x128xf32, #tpu.memory_space<vmem>>, vector<4x128xf32>
    %c0_1 = arith.constant 0 : index
    %c0_2 = arith.constant 0 : index
    %1 = vector.load %arg2[%c0_1, %c0_2] : memref<16x4xf32, #tpu.memory_space<vmem>>, vector<16x4xf32>
    %c0_3 = arith.constant 0 : index
    %c0_4 = arith.constant 0 : index
    %2 = vector.load %arg3[%c0_3, %c0_4] : memref<16x1xf32, #tpu.memory_space<vmem>>, vector<16x1xf32>
    %c0_5 = arith.constant 0 : index
    %c0_6 = arith.constant 0 : index
    %3 = vector.load %arg4[%c0_5, %c0_6] : memref<16x2xf32, #tpu.memory_space<vmem>>, vector<16x2xf32>
    %c0_7 = arith.constant 0 : index
    %c0_8 = arith.constant 0 : index
    %4 = vector.load %arg5[%c0_7, %c0_8] : memref<2x1xf32, #tpu.memory_space<vmem>>, vector<2x1xf32>
    %5 = vector.extract_strided_slice %1 {offsets = [0, 0], sizes = [16, 1], strides = [1, 1]} : vector<16x4xf32> to vector<16x1xf32>
    %6 = vector.extract_strided_slice %0 {offsets = [0, 0], sizes = [1, 128], strides = [1, 1]} : vector<4x128xf32> to vector<1x128xf32>
    %7 = vector.broadcast %5 : vector<16x1xf32> to vector<16x128xf32>
    %8 = vector.broadcast %6 : vector<1x128xf32> to vector<16x128xf32>
    %9 = arith.mulf %7, %8 : vector<16x128xf32>
    %10 = vector.extract_strided_slice %1 {offsets = [0, 1], sizes = [16, 1], strides = [1, 1]} : vector<16x4xf32> to vector<16x1xf32>
    %11 = vector.extract_strided_slice %0 {offsets = [1, 0], sizes = [1, 128], strides = [1, 1]} : vector<4x128xf32> to vector<1x128xf32>
    %12 = vector.broadcast %10 : vector<16x1xf32> to vector<16x128xf32>
    %13 = vector.broadcast %11 : vector<1x128xf32> to vector<16x128xf32>
    %14 = arith.mulf %12, %13 : vector<16x128xf32>
    %15 = arith.addf %9, %14 : vector<16x128xf32>
    %16 = vector.extract_strided_slice %1 {offsets = [0, 2], sizes = [16, 1], strides = [1, 1]} : vector<16x4xf32> to vector<16x1xf32>
    %17 = vector.extract_strided_slice %0 {offsets = [2, 0], sizes = [1, 128], strides = [1, 1]} : vector<4x128xf32> to vector<1x128xf32>
    %18 = vector.broadcast %16 : vector<16x1xf32> to vector<16x128xf32>
    %19 = vector.broadcast %17 : vector<1x128xf32> to vector<16x128xf32>
    %20 = arith.mulf %18, %19 : vector<16x128xf32>
    %21 = arith.addf %15, %20 : vector<16x128xf32>
    %22 = vector.extract_strided_slice %1 {offsets = [0, 3], sizes = [16, 1], strides = [1, 1]} : vector<16x4xf32> to vector<16x1xf32>
    %23 = vector.extract_strided_slice %0 {offsets = [3, 0], sizes = [1, 128], strides = [1, 1]} : vector<4x128xf32> to vector<1x128xf32>
    %24 = vector.broadcast %22 : vector<16x1xf32> to vector<16x128xf32>
    %25 = vector.broadcast %23 : vector<1x128xf32> to vector<16x128xf32>
    %26 = arith.mulf %24, %25 : vector<16x128xf32>
    %27 = arith.addf %21, %26 : vector<16x128xf32>
    %28 = vector.broadcast %2 : vector<16x1xf32> to vector<16x128xf32>
    %29 = arith.addf %27, %28 : vector<16x128xf32>
    %cst = arith.constant 0.000000e+00 : f32
    %30 = vector.broadcast %cst : f32 to vector<16x128xf32>
    %31 = arith.maximumf %29, %30 : vector<16x128xf32>
    %32 = vector.extract_strided_slice %3 {offsets = [0, 1], sizes = [16, 1], strides = [1, 1]} : vector<16x2xf32> to vector<16x1xf32>
    %33 = vector.extract_strided_slice %3 {offsets = [0, 0], sizes = [16, 1], strides = [1, 1]} : vector<16x2xf32> to vector<16x1xf32>
    %34 = arith.subf %32, %33 : vector<16x1xf32>
    %35 = vector.extract_strided_slice %4 {offsets = [1, 0], sizes = [1, 1], strides = [1, 1]} : vector<2x1xf32> to vector<1x1xf32>
    %36 = vector.extract_strided_slice %4 {offsets = [0, 0], sizes = [1, 1], strides = [1, 1]} : vector<2x1xf32> to vector<1x1xf32>
    %37 = arith.subf %35, %36 : vector<1x1xf32>
    %38 = vector.broadcast %34 : vector<16x1xf32> to vector<16x128xf32>
    %39 = arith.mulf %38, %31 : vector<16x128xf32>
    %cst_9 = arith.constant dense<0.000000e+00> : vector<128xf32>
    %40 = vector.multi_reduction <add>, %39, %cst_9 [0] : vector<16x128xf32> to vector<128xf32>
    %41 = vector.shape_cast %40 : vector<128xf32> to vector<1x128xf32>
    %42 = vector.broadcast %37 : vector<1x1xf32> to vector<1x128xf32>
    %43 = arith.addf %41, %42 : vector<1x128xf32>
    %44 = math.absf %43 : vector<1x128xf32>
    %cst_10 = arith.constant 0.000000e+00 : f32
    %45 = vector.broadcast %cst_10 : f32 to vector<1x128xf32>
    %46 = arith.subf %45, %44 : vector<1x128xf32>
    %47 = math.exp %46 : vector<1x128xf32>
    %cst_11 = arith.constant 1.000000e+00 : f32
    %48 = vector.broadcast %cst_11 : f32 to vector<1x128xf32>
    %49 = arith.addf %48, %47 : vector<1x128xf32>
    %50 = tpu.reciprocal %49 {approx = true} : vector<1x128xf32> -> vector<1x128xf32>
    %51 = arith.mulf %49, %50 : vector<1x128xf32>
    %cst_12 = arith.constant 2.000000e+00 : f32
    %52 = vector.broadcast %cst_12 : f32 to vector<1x128xf32>
    %53 = arith.subf %52, %51 : vector<1x128xf32>
    %54 = arith.mulf %50, %53 : vector<1x128xf32>
    %55 = arith.mulf %47, %54 : vector<1x128xf32>
    %cst_13 = arith.constant 0.000000e+00 : f32
    %56 = vector.broadcast %cst_13 : f32 to vector<1x128xf32>
    %57 = arith.cmpf oge, %43, %56 : vector<1x128xf32>
    %58 = arith.select %57, %55, %54 : vector<1x128xi1>, vector<1x128xf32>
    %c0_14 = arith.constant 0 : index
    %c0_15 = arith.constant 0 : index
    %59 = vector.load %arg6[%c0_14, %c0_15] : memref<2x128xf32, #tpu.memory_space<vmem>>, vector<1x128xf32>
    tpu.vector_store %arg6[%c0_14, %c0_15], %58 {strides = array<i32>} : memref<2x128xf32, #tpu.memory_space<vmem>>, vector<1x128xf32>,
    %60 = arith.select %57, %54, %55 : vector<1x128xi1>, vector<1x128xf32>
    %c1 = arith.constant 1 : index
    %c0_16 = arith.constant 0 : index
    %61 = vector.load %arg6[%c1, %c0_16] : memref<2x128xf32, #tpu.memory_space<vmem>>, vector<1x128xf32>
    tpu.vector_store %arg6[%c1, %c0_16], %60 {strides = array<i32>} : memref<2x128xf32, #tpu.memory_space<vmem>>, vector<1x128xf32>,
    return
  }
  func.func @transform_0(%arg0: i32) -> (i32, i32) {
    %c0_i32 = arith.constant 0 : i32
    %c0_i32_0 = arith.constant 0 : i32
    return %c0_i32, %arg0 : i32, i32
  }
  func.func @transform_1(%arg0: i32) -> (i32, i32) {
    %c0_i32 = arith.constant 0 : i32
    %c0_i32_0 = arith.constant 0 : i32
    %c0_i32_1 = arith.constant 0 : i32
    return %c0_i32, %c0_i32_0 : i32, i32
  }
  func.func @transform_2(%arg0: i32) -> (i32, i32) {
    %c0_i32 = arith.constant 0 : i32
    %c0_i32_0 = arith.constant 0 : i32
    %c0_i32_1 = arith.constant 0 : i32
    return %c0_i32, %c0_i32_0 : i32, i32
  }
  func.func @transform_3(%arg0: i32) -> (i32, i32) {
    %c0_i32 = arith.constant 0 : i32
    %c0_i32_0 = arith.constant 0 : i32
    %c0_i32_1 = arith.constant 0 : i32
    return %c0_i32, %c0_i32_0 : i32, i32
  }
  func.func @transform_4(%arg0: i32) -> (i32, i32) {
    %c0_i32 = arith.constant 0 : i32
    %c0_i32_0 = arith.constant 0 : i32
    %c0_i32_1 = arith.constant 0 : i32
    return %c0_i32, %c0_i32_0 : i32, i32
  }
  func.func @transform_5(%arg0: i32) -> (i32, i32) {
    %c0_i32 = arith.constant 0 : i32
    %c0_i32_0 = arith.constant 0 : i32
    return %c0_i32, %arg0 : i32, i32
  }
}

</mosaic_0001>

<llo_original>
// kernel: tpu_custom_call.1
$region0: #{tpu_custom_call.1}
  #allocation0 [shape = 'u32[]', space=smem, size = 0x4, offset = 0x4, fixed_abs, tag = 'smem constant byte address 0x4 - core index']
  #allocation1 [shape = 'u32[144,128]{1,0:T(1,128)}', space=vmem, size = 0x12000, scoped, tag = 'internal scratch']
  %s0 = inlined_call_operand.vmem [shape: f32[4,128], index: 0, kind: input, shape index: {}]
  %s1 = inlined_call_operand.vmem [shape: f32[16,4], index: 1, kind: input, shape index: {}]
  %s2 = inlined_call_operand.vmem [shape: f32[16,1], index: 2, kind: input, shape index: {}]
  %s3 = inlined_call_operand.vmem [shape: f32[16,2], index: 3, kind: input, shape index: {}]
  %s4 = inlined_call_operand.vmem [shape: f32[2,1], index: 4, kind: input, shape index: {}]
  %s5 = inlined_call_operand.hbm [shape: f32[2,128], index: 5, kind: output, shape index: {}]
  %s6 = sld [smem:[#allocation0]]
  $region30: #{tpu_custom_call.1} parent=0
    _
  %s8 = ssub.s32 1, %s6
  %s9 = scalar_select 0, %s8, %s6
  $region1: #{tpu_custom_call.1} parent=0
    #allocation2 [shape = 'u8[1024]{0}', space=vmem, size = 0x400, scoped, tag = 'output window, operand 0, single buffered']
    #allocation3 [shape = 's32[1]{0}', space=sflag, size = 0x4, scoped, tag = 'scoped memory for tpu_custom_call.1']
    %10 = vsyncpa [#allocation3], 0
    // Predicated region
    $region2: #{tpu_custom_call.1} parent=1 // pred_check
      _
    $region3: #{tpu_custom_call.1} parent=1 // pred_check_branch
      %12 = sbr.rel (0) target = $region5
    $region4: #{tpu_custom_call.1} parent=1 // pred_region
      _
    $region5: #{tpu_custom_call.1} parent=1 // pred_fallthru
      _
    // Predicated region
    $region6: #{tpu_custom_call.1} parent=1 // pred_check
      _
    $region7: #{tpu_custom_call.1} parent=1 // pred_check_branch
      %14 = sbr.rel (0) target = $region9
    $region8: #{tpu_custom_call.1} parent=1 // pred_region
      _
    $region9: #{tpu_custom_call.1} parent=1 // pred_fallthru
      _
    // Predicated region
    $region10: #{tpu_custom_call.1} parent=1 // pred_check
      _
    $region11: #{tpu_custom_call.1} parent=1 // pred_check_branch
      %16 = sbr.rel (0) target = $region13
    $region12: #{tpu_custom_call.1} parent=1 // pred_region
      _
    $region13: #{tpu_custom_call.1} parent=1 // pred_fallthru
      _
    // Predicated region
    $region14: #{tpu_custom_call.1} parent=1 // pred_check
      _
    $region15: #{tpu_custom_call.1} parent=1 // pred_check_branch
      %18 = sbr.rel (0) target = $region17
    $region16: #{tpu_custom_call.1} parent=1 // pred_region
      _
    $region17: #{tpu_custom_call.1} parent=1 // pred_fallthru
      _
    // Predicated region
    $region18: #{tpu_custom_call.1} parent=1 // pred_check
      _
    $region19: #{tpu_custom_call.1} parent=1 // pred_check_branch
      %20 = sbr.rel (0) target = $region21
    $region20: #{tpu_custom_call.1} parent=1 // pred_region
      _
    $region21: #{tpu_custom_call.1} parent=1 // pred_fallthru
      _
    %v21 = vld [vmem:[%s0] sm:$0xf]
    %v22 = vld [vmem:[%s1] sm:$0xff]
    %v23 = vld [vmem:[%s1 + $0x8] sm:$0xff]
    %v24 = vld [vmem:[%s2] sm:$0xff]
    %v25 = vld [vmem:[%s2 + $0x8] sm:$0xff]
    %v26 = vld [vmem:[%s3] sm:$0xff]
    %v27 = vld [vmem:[%s3 + $0x8] sm:$0xff]
    %v28 = vld [vmem:[%s4] sm:$0x3]
    %30 = vset.pattern.permute.xlu0 0
    %31 = vperm.xlu0 %30, %v22
    %v32 = vpop.permute.xlu0 %31
    %35 = vset.pattern.permute.xlu0 0
    %36 = vperm.xlu0 %35, %v23
    %v37 = vpop.permute.xlu0 %36
    %v39 = vlaneseq
    %v40 = vshrl.u32 %v39, 7
    %v41 = vsub.s32 0, %v40
    %v42 = vrot.slane %v21, %v41
    %v43 = vmul.f32 %v32, %v42
    %v44 = vmul.f32 %v37, %v42
    %45 = vset.pattern.permute.xlu0 1
    %46 = vperm.xlu0 %45, %v22
    %v47 = vpop.permute.xlu0 %46
    %49 = vset.pattern.permute.xlu0 1
    %50 = vperm.xlu0 %49, %v23
    %v51 = vpop.permute.xlu0 %50
    %v53 = vlaneseq
    %v54 = vshrl.u32 %v53, 7
    %v55 = vsub.s32 1, %v54
    %v56 = vrot.slane %v21, %v55
    %v57 = vmul.f32 %v47, %v56
    %v58 = vmul.f32 %v51, %v56
    %v59 = vadd.f32 %v43, %v57
    %v60 = vadd.f32 %v44, %v58
    %61 = vset.pattern.permute.xlu0 2
    %62 = vperm.xlu0 %61, %v22
    %v63 = vpop.permute.xlu0 %62
    %65 = vset.pattern.permute.xlu0 2
    %66 = vperm.xlu0 %65, %v23
    %v67 = vpop.permute.xlu0 %66
    %v69 = vlaneseq
    %v70 = vshrl.u32 %v69, 7
    %v71 = vsub.s32 2, %v70
    %v72 = vrot.slane %v21, %v71
    %v73 = vmul.f32 %v63, %v72
    %v74 = vmul.f32 %v67, %v72
    %v75 = vadd.f32 %v59, %v73
    %v76 = vadd.f32 %v60, %v74
    %77 = vset.pattern.permute.xlu0 3
    %78 = vperm.xlu0 %77, %v22
    %v79 = vpop.permute.xlu0 %78
    %81 = vset.pattern.permute.xlu0 3
    %82 = vperm.xlu0 %81, %v23
    %v83 = vpop.permute.xlu0 %82
    %v85 = vlaneseq
    %v86 = vshrl.u32 %v85, 7
    %v87 = vsub.s32 3, %v86
    %v88 = vrot.slane %v21, %v87
    %v89 = vmul.f32 %v79, %v88
    %v90 = vmul.f32 %v83, %v88
    %v91 = vadd.f32 %v75, %v89
    %v92 = vadd.f32 %v76, %v90
    %94 = vset.pattern.permute.xlu0 0
    %95 = vperm.xlu0 %94, %v24
    %v96 = vpop.permute.xlu0 %95
    %99 = vset.pattern.permute.xlu0 0
    %100 = vperm.xlu0 %99, %v25
    %v101 = vpop.permute.xlu0 %100
    %v103 = vadd.f32 %v91, %v96
    %v104 = vadd.f32 %v92, %v101
    %v105 = vmax.f32 %v103, 0.0
    %v106 = vmax.f32 %v104, 0.0
    %109 = vrot.lane.b32.xlu0 %v26, 1
    %v110 = vpop.permute.xlu0 %109
    %111 = vrot.lane.b32.xlu0 %v27, 1
    %v112 = vpop.permute.xlu0 %111
    %v115 = vsub.f32 %v26, %v110
    %v116 = vsub.f32 %v27, %v112
    %v118 = vrot.slane %v28, 7
    %v120 = vsub.f32 %v28, %v118
    %122 = vset.pattern.permute.xlu0 1
    %123 = vperm.xlu0 %122, %v115
    %v124 = vpop.permute.xlu0 %123
    %127 = vset.pattern.permute.xlu0 1
    %128 = vperm.xlu0 %127, %v116
    %v129 = vpop.permute.xlu0 %128
    %v131 = vmul.f32 %v124, %v105
    %v132 = vmul.f32 %v129, %v106
    %v133 = vadd.f32 %v131, %v132
    %v134 = vrot.slane %v133, 4
    %v135 = vadd.f32 %v133, %v134
    %v136 = vrot.slane %v135, 2
    %v137 = vadd.f32 %v135, %v136
    %v138 = vrot.slane %v137, 1
    %v139 = vadd.f32 %v137, %v138
    %141 = vset.pattern.permute.xlu0 0
    %142 = vperm.xlu0 %141, %v120
    %v143 = vpop.permute.xlu0 %142
    %v145 = vadd.f32 %v139, %v143
    %v146 = vand.u32 2147483647, %v145
    %v147 = vsub.f32 0.0, %v146
    %v148 = vmul.f32 %v147, 1.442695
    %v149 = vpow.pop %v148
    %v150 = vadd.f32 %v149, 1.0
    %v151 = vrcp.pop %v150
    %v152 = vmul.f32 %v150, %v151
    %v153 = vsub.f32 2.0, %v152
    %v154 = vmul.f32 %v151, %v153
    %v155 = vmul.f32 %v149, %v154
    %vm156 = vcmp.ge.f32.partialorder %v145, 0.0
    %v157 = vsel %vm156, %v155, %v154
    %158 = vst [vmem:[#allocation2 - $0x1] sm:$0x2] %v157
    %v159 = vsel %vm156, %v154, %v155
    %160 = vst [vmem:[#allocation2] sm:$0x2] %v159
    // Predicated region
    $region22: #{tpu_custom_call.1} parent=1 // pred_check
      _
    $region23: #{tpu_custom_call.1} parent=1 // pred_check_branch
      %162 = sbr.rel (0) target = $region25
    $region24: #{tpu_custom_call.1} parent=1 // pred_region
      %s164 = ssub.s32 32, 32
      %165 = vsyncadd [#allocation3], %s164
      %s167 = sshll.u32 [#allocation2], 4
      %s168 = int_to_ptr.vmem [resolvable:$true] %s167
      %170 = dma.vmem_to_hbm [thread:$0]  %s168, 32, %s5, [#allocation3]
    $region25: #{tpu_custom_call.1} parent=1 // pred_fallthru
      _
    // Predicated region
    $region26: #{tpu_custom_call.1} parent=1 // pred_check
      _
    $region27: #{tpu_custom_call.1} parent=1 // pred_check_branch
      %172 = sbr.rel (0) target = $region29
    $region28: #{tpu_custom_call.1} parent=1 // pred_region
      %173 = dma.done [#allocation3], 32
    $region29: #{tpu_custom_call.1} parent=1 // pred_fallthru
      _
    %174 = vsyncpa [#allocation3], 1

</llo_original>
